<compile_context>
chip_gen: v5e
topology: v5e:2x2
jax: 0.10.0
libtpu: 0.0.40
codegen_flags: <defaults>
</compile_context>

<pallas_src>
import jax
import jax.numpy as jnp
from jax.experimental import pallas as pl
from jax.experimental.pallas import tpu as pltpu


# ----------------------------- small helpers --------------------------------

def _round_up(x: int, m: int) -> int:
    return ((x + m - 1) // m) * m


def _cdiv(a: int, b: int) -> int:
    return (a + b - 1) // b


def _tpu_vmem_capacity_bytes() -> int:
    try:
        return int(pltpu.get_tpu_info().vmem_capacity_bytes)
    except Exception:
        return 64 * 1024 * 1024  # conservative (v7x-sized) fallback


def _device_kind() -> str:
    try:
        return jax.devices()[0].device_kind.lower()
    except Exception:
        return ""


def _lane_multiple(kind: str) -> int:
    # v6e / v7x MXUs are 2x256^2 -> prefer 256-wide padding; v5e (4x128^2)
    # and older parts keep the native 128.
    for old in ("v2", "v3", "v4", "v5"):
        if old in kind:
            return 128
    return 256


def _num_tensorcores(kind: str) -> int:
    return 2 if "v7" in kind else 1


def _divisor_chunks(H_p: int):
    """Multiples of 128 that exactly divide H_p, descending (first == H_p)."""
    q = H_p // 128
    return [128 * m for m in range(q, 0, -1) if q % m == 0]


# ------------------------------- kernels -------------------------------------

def _ffn_kernel_resident(x_ref, w1_ref, b1_ref, w2_ref, b2_ref, o_ref):
    # x_ref: (TM, D_in)   w1_ref: (D_in, H) cdt   b1_ref: (1, H) f32
    # w2_ref: (H, D_out)  b2_ref: (1, D_out) f32  o_ref: (TM, D_out)
    x = x_ref[...].astype(w1_ref.dtype)                      # cast in-kernel (VPU)
    h = jnp.dot(x, w1_ref[...], preferred_element_type=jnp.float32)
    h = jnp.maximum(h + b1_ref[...], 0.0).astype(w2_ref.dtype)
    y = jnp.dot(h, w2_ref[...], preferred_element_type=jnp.float32) + b2_ref[...]
    o_ref[...] = y.astype(o_ref.dtype)


def _ffn_kernel_hchunk(x_ref, w1_ref, b1_ref, w2_ref, b2_ref, o_ref, acc_ref):
    # Grid: (row tiles, H chunks). acc_ref: (TM, D_out) f32 accumulator.
    hk = pl.program_id(1)

    @pl.when(hk == 0)
    def _():
        acc_ref[...] = jnp.zeros_like(acc_ref)

    x = x_ref[...].astype(w1_ref.dtype)
    h = jnp.dot(x, w1_ref[...], preferred_element_type=jnp.float32)
    h = jnp.maximum(h + b1_ref[...], 0.0).astype(w2_ref.dtype)
    acc_ref[...] += jnp.dot(h, w2_ref[...], preferred_element_type=jnp.float32)

    @pl.when(hk == pl.num_programs(1) - 1)
    def _():
        o_ref[...] = (acc_ref[...] + b2_ref[...]).astype(o_ref.dtype)


# --------------------------- parameter preparation ---------------------------

def prepare_ffn_params(w1, b1, w2, b2, *, compute_dtype=jnp.bfloat16):
    """Cast / lane-pad the FFN weights ONCE (hoisted out of the per-call path).

    w1: (D_in, H); b1: (H,); w2: (H, D_out); b2: (D_out,).
    (PyTorch stores Linear weight as (out, in); pass the transpose.)
    """
    D_in, H = w1.shape
    D_out = w2.shape[1]
    cdt = jnp.dtype(compute_dtype)
    lane = _lane_multiple(_device_kind())
    pad = lambda d: d if d % 128 == 0 else _round_up(d, lane)
    D_in_p, H_p, D_out_p = pad(D_in), pad(H), pad(D_out)

    if (D_in_p, H_p) == (D_in, H):
        w1_p = w1.astype(cdt)
    else:
        w1_p = jnp.zeros((D_in_p, H_p), cdt).at[:D_in, :H].set(w1.astype(cdt))
    if (H_p, D_out_p) == (H, D_out):
        w2_p = w2.astype(cdt)
    else:
        w2_p = jnp.zeros((H_p, D_out_p), cdt).at[:H, :D_out].set(w2.astype(cdt))
    if H_p == H:
        b1_p = b1.astype(jnp.float32).reshape(1, H)
    else:
        b1_p = jnp.zeros((1, H_p), jnp.float32).at[0, :H].set(b1.astype(jnp.float32))
    if D_out_p == D_out:
        b2_p = b2.astype(jnp.float32).reshape(1, D_out)
    else:
        b2_p = jnp.zeros((1, D_out_p), jnp.float32).at[0, :D_out].set(
            b2.astype(jnp.float32))

    return dict(w1=w1_p, b1=b1_p, w2=w2_p, b2=b2_p,
                dims=(D_in, H, D_out), compute_dtype=cdt)


# ------------------------------ tile selection --------------------------------

def _select_tiles(M_al, D_in_p, H_p, D_out_p, x_isz, out_isz, c_isz,
                  vmem_cap, num_cores, tile_m=None, hidden_chunk=None):
    budget = int(0.70 * vmem_cap)
    tm_pref = 512 if vmem_cap >= 96 * 1024 * 1024 else 256

    def footprint(tm, th, w_bufs):
        return (2 * tm * D_in_p * x_isz                                 # X tiles (dbl)
                + 2 * tm * D_out_p * out_isz                            # Y tiles (dbl)
                + w_bufs * (D_in_p * th + th * D_out_p) * c_isz         # W1 / W2
                + w_bufs * (th + D_out_p) * 4                           # biases (f32)
                + tm * th * 4                                           # f32 hidden
                + tm * D_out_p * 4)                                     # f32 acc/result

    tm = tile_m if tile_m is not None else tm_pref
    tm = max(8, min(_round_up(tm, 8), M_al))
    if num_cores > 1 and tile_m is None:
        # keep >= num_cores row tiles so the "parallel" axis feeds both TCs
        tm = min(tm, max(8, _round_up(_cdiv(M_al, num_cores), 8)))

    chunks = _divisor_chunks(H_p)   # descending; chunks[0] == H_p

    if hidden_chunk is not None:
        th = next((c for c in chunks if c <= max(int(hidden_chunk), 128)), chunks[-1])
        return tm, th, footprint(tm, th, 1 if th == H_p else 2)

    for th in chunks:
        w_bufs = 1 if th == H_p else 2
        if footprint(tm, th, w_bufs) <= budget:
            return tm, th, footprint(tm, th, w_bufs)

    th = chunks[-1]
    while tm > 64 and footprint(tm, th, 2) > budget:
        tm = max(64, _round_up(tm // 2, 8))
    return tm, th, footprint(tm, th, 2)


# --------------------------------- forward ------------------------------------

def position_wise_ffn(x, params, *, tile_m=None, hidden_chunk=None, out_dtype=None):
    """x: (..., D_in); params from prepare_ffn_params(). Returns (..., D_out)."""
    D_in, H, D_out = params["dims"]
    w1_p, b1_p, w2_p, b2_p = params["w1"], params["b1"], params["w2"], params["b2"]
    D_in_p, H_p = w1_p.shape
    D_out_p = w2_p.shape[1]
    cdt = params["compute_dtype"]

    assert x.shape[-1] == D_in
    lead = x.shape[:-1]
    M = 1
    for d in lead:
        M *= int(d)
    out_dt = jnp.dtype(out_dtype) if out_dtype is not None else x.dtype

    kind = _device_kind()
    vmem_cap = _tpu_vmem_capacity_bytes()
    num_cores = _num_tensorcores(kind)

    # Row axis: only align to the 8-sublane multiple (rare); ragged row tiles
    # are handled by a cdiv grid (masked writes) — no full-M padding pass.
    M_al = _round_up(M, 8)
    x2d = x.reshape(M, D_in)
    if D_in_p == D_in and M_al == M:
        x_in = x2d                                   # stream as-is, cast in-kernel
    else:
        x_in = jnp.zeros((M_al, D_in_p), cdt).at[:M, :D_in].set(x2d.astype(cdt))

    x_isz = jnp.dtype(x_in.dtype).itemsize
    out_isz = out_dt.itemsize
    c_isz = cdt.itemsize

    TM, TH, fp_bytes = _select_tiles(M_al, D_in_p, H_p, D_out_p, x_isz, out_isz,
                                     c_isz, vmem_cap, num_cores,
                                     tile_m=tile_m, hidden_chunk=hidden_chunk)
    grid_m = _cdiv(M_al, TM)
    grid_h = H_p // TH

    # Advisory cost estimate for XLA's scheduler.
    flops = 2 * M * (D_in_p * H_p + H_p * D_out_p)
    bytes_accessed = (x_in.size * x_isz
                      + w1_p.size * c_isz + w2_p.size * c_isz
                      + b1_p.size * 4 + b2_p.size * 4
                      + M_al * D_out_p * out_isz)
    cost = pl.CostEstimate(flops=int(flops), transcendentals=0,
                           bytes_accessed=int(bytes_accessed))

    # Scoped VMEM: computed footprint + headroom, capped at ~80% of physical.
    vmem_limit = int(min(max(int(fp_bytes * 1.25), 32 * 1024 * 1024),
                         int(0.80 * vmem_cap)))

    resident = pl.Buffered(1)   # constant index_map -> no second in-flight copy

    if grid_h == 1:
        grid_spec = pltpu.PrefetchScalarGridSpec(
            num_scalar_prefetch=0,
            grid=(grid_m,),
            in_specs=[
                pl.BlockSpec((TM, D_in_p), lambda i: (i, 0)),              # stream X
                pl.BlockSpec((D_in_p, H_p), lambda i: (0, 0),
                             pipeline_mode=resident),                      # resident W1
                pl.BlockSpec((1, H_p), lambda i: (0, 0),
                             pipeline_mode=resident),                      # resident b1
                pl.BlockSpec((H_p, D_out_p), lambda i: (0, 0),
                             pipeline_mode=resident),                      # resident W2
                pl.BlockSpec((1, D_out_p), lambda i: (0, 0),
                             pipeline_mode=resident),                      # resident b2
            ],
            out_specs=pl.BlockSpec((TM, D_out_p), lambda i: (i, 0)),       # stream Y
        )
        kernel = _ffn_kernel_resident
        dims_sem = ("parallel",)
    else:
        grid_spec = pltpu.PrefetchScalarGridSpec(
            num_scalar_prefetch=0,
            grid=(grid_m, grid_h),
            in_specs=[
                pl.BlockSpec((TM, D_in_p), lambda i, h: (i, 0)),           # X (reused over h)
                pl.BlockSpec((D_in_p, TH), lambda i, h: (0, h)),           # stream W1 cols
                pl.BlockSpec((1, TH), lambda i, h: (0, h)),                # stream b1 chunk
                pl.BlockSpec((TH, D_out_p), lambda i, h: (h, 0)),          # stream W2 rows
                pl.BlockSpec((1, D_out_p), lambda i, h: (0, 0),
                             pipeline_mode=resident),                      # resident b2
            ],
            out_specs=pl.BlockSpec((TM, D_out_p), lambda i, h: (i, 0)),
            scratch_shapes=[pltpu.VMEM((TM, D_out_p), jnp.float32)],
        )
        kernel = _ffn_kernel_hchunk
        dims_sem = ("parallel", "arbitrary")

    out = pl.pallas_call(
        kernel,
        out_shape=jax.ShapeDtypeStruct((M_al, D_out_p), out_dt),
        grid_spec=grid_spec,
        compiler_params=pltpu.CompilerParams(
            dimension_semantics=dims_sem,
            vmem_limit_bytes=vmem_limit,
        ),
        cost_estimate=cost,
    )(x_in, w1_p, b1_p, w2_p, b2_p)

    if M_al != M or D_out_p != D_out:
        out = out[:M, :D_out]
    return out.reshape(*lead, D_out)


# -------------------------------- reference -----------------------------------

def _reference(x, w1, b1, w2, b2, compute_dtype=jnp.bfloat16, out_dtype=None):
    """Pure-JAX reference with the same bf16-matmul / f32-accumulate recipe."""
    out_dt = jnp.dtype(out_dtype) if out_dtype is not None else x.dtype
    cdt = jnp.dtype(compute_dtype)
    lead = x.shape[:-1]
    xb = x.reshape(-1, x.shape[-1]).astype(cdt)
    h = jnp.dot(xb, w1.astype(cdt), preferred_element_type=jnp.float32)
    h = jnp.maximum(h + b1.astype(jnp.float32), 0.0).astype(cdt)
    y = jnp.dot(h, w2.astype(cdt), preferred_element_type=jnp.float32)
    y = y + b2.astype(jnp.float32)
    return y.reshape(*lead, w2.shape[1]).astype(out_dt)


# ----------------------------------- main --------------------------------------

if __name__ == "__main__":
    key = jax.random.PRNGKey(0)
    keys = jax.random.split(key, 10)

    # ---- test 1: module-sized small shapes (features need lane padding) ------
    ffn_num_input, ffn_num_hiddens, ffn_num_outputs = 16, 32, 16
    batch, seq = 2, 8
    bd1 = 1.0 / (ffn_num_input ** 0.5)
    bd2 = 1.0 / (ffn_num_hiddens ** 0.5)
    w1 = jax.random.uniform(keys[0], (ffn_num_input, ffn_num_hiddens),
                            jnp.float32, -bd1, bd1)
    b1 = jax.random.uniform(keys[1], (ffn_num_hiddens,), jnp.float32, -bd1, bd1)
    w2 = jax.random.uniform(keys[2], (ffn_num_hiddens, ffn_num_outputs),
                            jnp.float32, -bd2, bd2)
    b2 = jax.random.uniform(keys[3], (ffn_num_outputs,), jnp.float32, -bd2, bd2)

    params = prepare_ffn_params(w1, b1, w2, b2)        # one-time weight cast/pad

    x = jax.random.normal(keys[4], (batch, seq, ffn_num_input), jnp.float32)
    out = position_wise_ffn(x, params)
    jax.block_until_ready(out)
    assert out.shape == (batch, seq, ffn_num_outputs)
    ref16 = _reference(x, w1, b1, w2, b2)              # precision-matched
    ref32 = jnp.maximum(x @ w1 + b1, 0.0) @ w2 + b2    # full f32
    assert jnp.allclose(out, ref16, atol=2e-5, rtol=2e-5)
    assert jnp.allclose(out, ref32, atol=3e-2, rtol=3e-2)

    # ---- test 2: 128-aligned features (no wrapper padding), multi row tiles --
    D, Hd, Do = 128, 256, 128
    s1 = 1.0 / (D ** 0.5)
    s2 = 1.0 / (Hd ** 0.5)
    W1 = jax.random.uniform(keys[5], (D, Hd), jnp.float32, -s1, s1)
    B1 = jax.random.uniform(keys[6], (Hd,), jnp.float32, -s1, s1)
    W2 = jax.random.uniform(keys[7], (Hd, Do), jnp.float32, -s2, s2)
    B2 = jax.random.uniform(keys[8], (Do,), jnp.float32, -s2, s2)
    params2 = prepare_ffn_params(W1, B1, W2, B2)

    x2 = jax.random.normal(keys[9], (4, 96, D), jnp.float32)
    out2 = position_wise_ffn(x2, params2, tile_m=128)          # grid_m = 3
    jax.block_until_ready(out2)
    ref2 = _reference(x2, W1, B1, W2, B2)
    assert out2.shape == (4, 96, Do)
    assert jnp.allclose(out2, ref2, atol=1e-4, rtol=1e-4)

    # ---- test 3: force the H-chunked accumulator path (grid_h = 2) -----------
    out3 = position_wise_ffn(x2, params2, tile_m=128, hidden_chunk=128)
    jax.block_until_ready(out3)
    assert jnp.allclose(out3, ref2, atol=1e-4, rtol=1e-4)

    print("KERNEL_OK")
</pallas_src>

<mosaic_0001>
module attributes {stable_mosaic.version = 11 : i64} {
  func.func @_ffn_kernel_resident(%arg0: i32, %arg1: memref<16x256xbf16, #tpu.memory_space<vmem>>, %arg2: memref<256x256xbf16, #tpu.memory_space<vmem>>, %arg3: memref<1x256xf32, #tpu.memory_space<vmem>>, %arg4: memref<256x256xbf16, #tpu.memory_space<vmem>>, %arg5: memref<1x256xf32, #tpu.memory_space<vmem>>, %arg6: memref<16x256xf32, #tpu.memory_space<vmem>>) attributes {dimension_semantics = [#tpu.dimension_semantics<parallel>], iteration_bounds = array<i64: 1>, scalar_prefetch = 0 : i64, scratch_operands = 0 : i64, tpu.core_type = #tpu.core_type<tc>, window_params = [{transform_indices = @transform_0, window_bounds = array<i64: 16, 256>}, {pipeline_mode = #tpu.pipeline_mode<synchronous>, transform_indices = @transform_1, window_bounds = array<i64: 256, 256>}, {pipeline_mode = #tpu.pipeline_mode<synchronous>, transform_indices = @transform_2, window_bounds = array<i64: 1, 256>}, {pipeline_mode = #tpu.pipeline_mode<synchronous>, transform_indices = @transform_3, window_bounds = array<i64: 256, 256>}, {pipeline_mode = #tpu.pipeline_mode<synchronous>, transform_indices = @transform_4, window_bounds = array<i64: 1, 256>}, {transform_indices = @transform_5, window_bounds = array<i64: 16, 256>}]} {
    %c0 = arith.constant 0 : index
    %c0_0 = arith.constant 0 : index
    %0 = vector.load %arg1[%c0, %c0_0] : memref<16x256xbf16, #tpu.memory_space<vmem>>, vector<16x256xbf16>
    %c0_1 = arith.constant 0 : index
    %c0_2 = arith.constant 0 : index
    %1 = vector.load %arg2[%c0_1, %c0_2] : memref<256x256xbf16, #tpu.memory_space<vmem>>, vector<256x256xbf16>
    %cst = arith.constant dense<0.000000e+00> : vector<16x256xf32>
    %2 = tpu.matmul %0, %1, %cst {dimension_numbers = #tpu.dot_dimension_numbers<[1], [0], [0], [1], [0, 0, 1, 1], [], []>} : vector<16x256xbf16>, vector<256x256xbf16>, vector<16x256xf32> -> vector<16x256xf32>
    %c0_3 = arith.constant 0 : index
    %c0_4 = arith.constant 0 : index
    %3 = vector.load %arg3[%c0_3, %c0_4] : memref<1x256xf32, #tpu.memory_space<vmem>>, vector<1x256xf32>
    %4 = vector.broadcast %3 : vector<1x256xf32> to vector<16x256xf32>
    %5 = arith.addf %2, %4 : vector<16x256xf32>
    %cst_5 = arith.constant 0.000000e+00 : f32
    %6 = vector.broadcast %cst_5 : f32 to vector<16x256xf32>
    %7 = arith.maximumf %5, %6 : vector<16x256xf32>
    %8 = arith.truncf %7 : vector<16x256xf32> to vector<16x256xbf16>
    %c0_6 = arith.constant 0 : index
    %c0_7 = arith.constant 0 : index
    %9 = vector.load %arg4[%c0_6, %c0_7] : memref<256x256xbf16, #tpu.memory_space<vmem>>, vector<256x256xbf16>
    %cst_8 = arith.constant dense<0.000000e+00> : vector<16x256xf32>
    %10 = tpu.matmul %8, %9, %cst_8 {dimension_numbers = #tpu.dot_dimension_numbers<[1], [0], [0], [1], [0, 0, 1, 1], [], []>} : vector<16x256xbf16>, vector<256x256xbf16>, vector<16x256xf32> -> vector<16x256xf32>
    %c0_9 = arith.constant 0 : index
    %c0_10 = arith.constant 0 : index
    %11 = vector.load %arg5[%c0_9, %c0_10] : memref<1x256xf32, #tpu.memory_space<vmem>>, vector<1x256xf32>
    %12 = vector.broadcast %11 : vector<1x256xf32> to vector<16x256xf32>
    %13 = arith.addf %10, %12 : vector<16x256xf32>
    %c0_11 = arith.constant 0 : index
    %c0_12 = arith.constant 0 : index
    %14 = vector.load %arg6[%c0_11, %c0_12] : memref<16x256xf32, #tpu.memory_space<vmem>>, vector<16x256xf32>
    tpu.vector_store %arg6[%c0_11, %c0_12], %13 {strides = array<i32>} : memref<16x256xf32, #tpu.memory_space<vmem>>, vector<16x256xf32>,
    return
  }
  func.func @transform_0(%arg0: i32) -> (i32, i32) {
    %c0_i32 = arith.constant 0 : i32
    %c0_i32_0 = arith.constant 0 : i32
    return %arg0, %c0_i32 : i32, i32
  }
  func.func @transform_1(%arg0: i32) -> (i32, i32) {
    %c0_i32 = arith.constant 0 : i32
    %c0_i32_0 = arith.constant 0 : i32
    %c0_i32_1 = arith.constant 0 : i32
    return %c0_i32, %c0_i32_0 : i32, i32
  }
  func.func @transform_2(%arg0: i32) -> (i32, i32) {
    %c0_i32 = arith.constant 0 : i32
    %c0_i32_0 = arith.constant 0 : i32
    %c0_i32_1 = arith.constant 0 : i32
    return %c0_i32, %c0_i32_0 : i32, i32
  }
  func.func @transform_3(%arg0: i32) -> (i32, i32) {
    %c0_i32 = arith.constant 0 : i32
    %c0_i32_0 = arith.constant 0 : i32
    %c0_i32_1 = arith.constant 0 : i32
    return %c0_i32, %c0_i32_0 : i32, i32
  }
  func.func @transform_4(%arg0: i32) -> (i32, i32) {
    %c0_i32 = arith.constant 0 : i32
    %c0_i32_0 = arith.constant 0 : i32
    %c0_i32_1 = arith.constant 0 : i32
    return %c0_i32, %c0_i32_0 : i32, i32
  }
  func.func @transform_5(%arg0: i32) -> (i32, i32) {
    %c0_i32 = arith.constant 0 : i32
    %c0_i32_0 = arith.constant 0 : i32
    return %arg0, %c0_i32 : i32, i32
  }
}

</mosaic_0001>

<llo_original>
// kernel: tpu_custom_call.1
$region0: #{tpu_custom_call.1}
  #allocation0 [shape = 'u32[]', space=smem, size = 0x4, offset = 0x4, fixed_abs, tag = 'smem constant byte address 0x4 - core index']
  #allocation1 [shape = 'u32[72,128]{1,0:T(1,128)}', space=vmem, size = 0x9000, scoped, tag = 'internal scratch']
  %s0 = inlined_call_operand.hbm [shape: bf16[16,256], index: 0, kind: input, shape index: {}]
  %s1 = inlined_call_operand.hbm [shape: bf16[256,256], index: 1, kind: input, shape index: {}]
  %s2 = inlined_call_operand.hbm [shape: f32[1,256], index: 2, kind: input, shape index: {}]
  %s3 = inlined_call_operand.hbm [shape: bf16[256,256], index: 3, kind: input, shape index: {}]
  %s4 = inlined_call_operand.vmem [shape: f32[1,256], index: 4, kind: input, shape index: {}]
  %s5 = inlined_call_operand.hbm [shape: f32[16,256], index: 5, kind: output, shape index: {}]
  %s6 = sld [smem:[#allocation0]]
  $region46: #{tpu_custom_call.1} parent=0
    _
  %s8 = ssub.s32 1, %s6
  %s9 = scalar_select 0, %s8, %s6
  $region1: #{tpu_custom_call.1} parent=0
    #allocation2 [shape = 'u8[8192]{0}', space=vmem, size = 0x2000, scoped, tag = 'input window, operand 0, single buffered']
    #allocation3 [shape = 's32[1]{0}', space=sflag, size = 0x4, scoped, tag = 'scoped memory for tpu_custom_call.1']
    #allocation4 [shape = 's32[1]{0}', space=sflag, size = 0x4, scoped, tag = 'scoped memory for tpu_custom_call.1']
    #allocation5 [shape = 'u8[131072]{0}', space=vmem, size = 0x20000, scoped, tag = 'input window, operand 1, single buffered']
    #allocation6 [shape = 's32[1]{0}', space=sflag, size = 0x4, scoped, tag = 'scoped memory for tpu_custom_call.1']
    #allocation7 [shape = 'u8[1024]{0}', space=vmem, size = 0x400, scoped, tag = 'input window, operand 2, single buffered']
    #allocation8 [shape = 'u8[131072]{0}', space=vmem, size = 0x20000, scoped, tag = 'input window, operand 3, single buffered']
    #allocation9 [shape = 's32[1]{0}', space=sflag, size = 0x4, scoped, tag = 'scoped memory for tpu_custom_call.1']
    #allocation10 [shape = 'u8[16384]{0}', space=vmem, size = 0x4000, scoped, tag = 'output window, operand 0, single buffered']
    %10 = vsyncpa [#allocation3], 0
    %11 = vsyncpa [#allocation6], 0
    %12 = vsyncpa [#allocation9], 0
    %13 = vsyncpa [#allocation4], 0
    // Predicated region
    $region2: #{tpu_custom_call.1} parent=1 // pred_check
      _
    $region3: #{tpu_custom_call.1} parent=1 // pred_check_branch
      %15 = sbr.rel (0) target = $region5
    $region4: #{tpu_custom_call.1} parent=1 // pred_region
      %17 = vsyncadd [#allocation3], 0
      %s18 = sshll.u32 %s0, 4
      %s19 = int_to_ptr.hbm [resolvable:$true] %s18
      %s20 = sshll.u32 [#allocation2], 4
      %s21 = int_to_ptr.vmem [resolvable:$true] %s20
      %26 = dma.hbm_to_vmem [thread:$0]  %s19, 256, %s21, [#allocation3], 128, 128, 8
    $region5: #{tpu_custom_call.1} parent=1 // pred_fallthru
      _
    // Predicated region
    $region6: #{tpu_custom_call.1} parent=1 // pred_check
      _
    $region7: #{tpu_custom_call.1} parent=1 // pred_check_branch
      %28 = sbr.rel (0) target = $region9
    $region8: #{tpu_custom_call.1} parent=1 // pred_region
      %30 = vsyncadd [#allocation6], 0
      %s31 = sshll.u32 %s1, 4
      %s32 = int_to_ptr.hbm [resolvable:$true] %s31
      %s33 = sshll.u32 [#allocation5], 4
      %s34 = int_to_ptr.vmem [resolvable:$true] %s33
      %39 = dma.hbm_to_vmem [thread:$0]  %s32, 4096, %s34, [#allocation6], 128, 128, 8
    $region9: #{tpu_custom_call.1} parent=1 // pred_fallthru
      _
    // Predicated region
    $region10: #{tpu_custom_call.1} parent=1 // pred_check
      _
    $region11: #{tpu_custom_call.1} parent=1 // pred_check_branch
      %41 = sbr.rel (0) target = $region13
    $region12: #{tpu_custom_call.1} parent=1 // pred_region
      %43 = vsyncadd [#allocation6], 0
      %s45 = sshll.u32 %s2, 4
      %s46 = int_to_ptr.hbm [resolvable:$true] %s45
      %s47 = sshll.u32 [#allocation7], 4
      %s48 = int_to_ptr.vmem [resolvable:$true] %s47
      %50 = dma.hbm_to_vmem [thread:$0]  %s46, 32, %s48, [#allocation6]
    $region13: #{tpu_custom_call.1} parent=1 // pred_fallthru
      _
    // Predicated region
    $region14: #{tpu_custom_call.1} parent=1 // pred_check
      _
    $region15: #{tpu_custom_call.1} parent=1 // pred_check_branch
      %52 = sbr.rel (0) target = $region17
    $region16: #{tpu_custom_call.1} parent=1 // pred_region
      %54 = vsyncadd [#allocation9], 0
      %s55 = sshll.u32 %s3, 4
      %s56 = int_to_ptr.hbm [resolvable:$true] %s55
      %s57 = sshll.u32 [#allocation8], 4
      %s58 = int_to_ptr.vmem [resolvable:$true] %s57
      %63 = dma.hbm_to_vmem [thread:$0]  %s56, 4096, %s58, [#allocation9], 128, 128, 8
    $region17: #{tpu_custom_call.1} parent=1 // pred_fallthru
      _
    // Predicated region
    $region18: #{tpu_custom_call.1} parent=1 // pred_check
      _
    $region19: #{tpu_custom_call.1} parent=1 // pred_check_branch
      %65 = sbr.rel (0) target = $region21
    $region20: #{tpu_custom_call.1} parent=1 // pred_region
      _
    $region21: #{tpu_custom_call.1} parent=1 // pred_fallthru
      _
    // Predicated region
    $region22: #{tpu_custom_call.1} parent=1 // pred_check
      _
    $region23: #{tpu_custom_call.1} parent=1 // pred_check_branch
      %67 = sbr.rel (0) target = $region25
    $region24: #{tpu_custom_call.1} parent=1 // pred_region
      %69 = dma.done [#allocation3], 256
    $region25: #{tpu_custom_call.1} parent=1 // pred_fallthru
      _
    // Predicated region
    $region26: #{tpu_custom_call.1} parent=1 // pred_check
      _
    $region27: #{tpu_custom_call.1} parent=1 // pred_check_branch
      %71 = sbr.rel (0) target = $region29
    $region28: #{tpu_custom_call.1} parent=1 // pred_region
      %73 = dma.done [#allocation6], 4096
    $region29: #{tpu_custom_call.1} parent=1 // pred_fallthru
      _
    // Predicated region
    $region30: #{tpu_custom_call.1} parent=1 // pred_check
      _
    $region31: #{tpu_custom_call.1} parent=1 // pred_check_branch
      %75 = sbr.rel (0) target = $region33
    $region32: #{tpu_custom_call.1} parent=1 // pred_region
      %77 = dma.done [#allocation6], 32
    $region33: #{tpu_custom_call.1} parent=1 // pred_fallthru
      _
    // Predicated region
    $region34: #{tpu_custom_call.1} parent=1 // pred_check
      _
    $region35: #{tpu_custom_call.1} parent=1 // pred_check_branch
      %79 = sbr.rel (0) target = $region37
    $region36: #{tpu_custom_call.1} parent=1 // pred_region
      %81 = dma.done [#allocation9], 4096
    $region37: #{tpu_custom_call.1} parent=1 // pred_fallthru
      _
    %v82 = vld [vmem:[#allocation2] sm:$0xff]
    %v83 = vld [vmem:[#allocation2 + $0x8] sm:$0xff]
    %v84 = vld [vmem:[#allocation5] sm:$0xff]
    %v85 = vld [vmem:[#allocation5 + $0x8] sm:$0xff]
    %v86 = vld [vmem:[#allocation5 + $0x10] sm:$0xff]
    %v87 = vld [vmem:[#allocation5 + $0x18] sm:$0xff]
    %v88 = vld [vmem:[#allocation5 + $0x20] sm:$0xff]
    %v89 = vld [vmem:[#allocation5 + $0x28] sm:$0xff]
    %v90 = vld [vmem:[#allocation5 + $0x30] sm:$0xff]
    %v91 = vld [vmem:[#allocation5 + $0x38] sm:$0xff]
    %v92 = vld [vmem:[#allocation5 + $0x40] sm:$0xff]
    %v93 = vld [vmem:[#allocation5 + $0x48] sm:$0xff]
    %v94 = vld [vmem:[#allocation5 + $0x50] sm:$0xff]
    %v95 = vld [vmem:[#allocation5 + $0x58] sm:$0xff]
    %v96 = vld [vmem:[#allocation5 + $0x60] sm:$0xff]
    %v97 = vld [vmem:[#allocation5 + $0x68] sm:$0xff]
    %v98 = vld [vmem:[#allocation5 + $0x70] sm:$0xff]
    %v99 = vld [vmem:[#allocation5 + $0x78] sm:$0xff]
    %v100 = vld [vmem:[#allocation5 + $0x80] sm:$0xff]
    %v101 = vld [vmem:[#allocation5 + $0x88] sm:$0xff]
    %v102 = vld [vmem:[#allocation5 + $0x90] sm:$0xff]
    %v103 = vld [vmem:[#allocation5 + $0x98] sm:$0xff]
    %v104 = vld [vmem:[#allocation5 + $0xa0] sm:$0xff]
    %v105 = vld [vmem:[#allocation5 + $0xa8] sm:$0xff]
    %v106 = vld [vmem:[#allocation5 + $0xb0] sm:$0xff]
    %v107 = vld [vmem:[#allocation5 + $0xb8] sm:$0xff]
    %v108 = vld [vmem:[#allocation5 + $0xc0] sm:$0xff]
    %v109 = vld [vmem:[#allocation5 + $0xc8] sm:$0xff]
    %v110 = vld [vmem:[#allocation5 + $0xd0] sm:$0xff]
    %v111 = vld [vmem:[#allocation5 + $0xd8] sm:$0xff]
    %v112 = vld [vmem:[#allocation5 + $0xe0] sm:$0xff]
    %v113 = vld [vmem:[#allocation5 + $0xe8] sm:$0xff]
    %v114 = vld [vmem:[#allocation5 + $0xf0] sm:$0xff]
    %v115 = vld [vmem:[#allocation5 + $0xf8] sm:$0xff]
    %v116 = vld [vmem:[#allocation7] sm:$0x3]
    %v118 = vperm.slane %v116, 0
    %v119 = vperm.slane %v116, 1
    %v124 = vunpack.c.l.b16 %v82
    %v125 = vunpack.c.h.b16 %v82
    %v126 = vunpack.c.l.b16 %v83
    %v127 = vunpack.c.h.b16 %v83
    %v128 = vpack.c.b16 %v126, %v124
    %v129 = vpack.c.b16 %v127, %v125
    %v164 = vunpack.c.l.b16 %v84
    %v165 = vunpack.c.h.b16 %v84
    %v166 = vunpack.c.l.b16 %v85
    %v167 = vunpack.c.h.b16 %v85
    %v168 = vunpack.c.l.b16 %v86
    %v169 = vunpack.c.h.b16 %v86
    %v170 = vunpack.c.l.b16 %v87
    %v171 = vunpack.c.h.b16 %v87
    %v172 = vunpack.c.l.b16 %v88
    %v173 = vunpack.c.h.b16 %v88
    %v174 = vunpack.c.l.b16 %v89
    %v175 = vunpack.c.h.b16 %v89
    %v176 = vunpack.c.l.b16 %v90
    %v177 = vunpack.c.h.b16 %v90
    %v178 = vunpack.c.l.b16 %v91
    %v179 = vunpack.c.h.b16 %v91
    %v180 = vunpack.c.l.b16 %v92
    %v181 = vunpack.c.h.b16 %v92
    %v182 = vunpack.c.l.b16 %v93
    %v183 = vunpack.c.h.b16 %v93
    %v184 = vunpack.c.l.b16 %v94
    %v185 = vunpack.c.h.b16 %v94
    %v186 = vunpack.c.l.b16 %v95
    %v187 = vunpack.c.h.b16 %v95
    %v188 = vunpack.c.l.b16 %v96
    %v189 = vunpack.c.h.b16 %v96
    %v190 = vunpack.c.l.b16 %v97
    %v191 = vunpack.c.h.b16 %v97
    %v192 = vunpack.c.l.b16 %v98
    %v193 = vunpack.c.h.b16 %v98
    %v194 = vunpack.c.l.b16 %v99
    %v195 = vunpack.c.h.b16 %v99
    %v196 = vunpack.c.l.b16 %v100
    %v197 = vunpack.c.h.b16 %v100
    %v198 = vunpack.c.l.b16 %v101
    %v199 = vunpack.c.h.b16 %v101
    %v200 = vunpack.c.l.b16 %v102
    %v201 = vunpack.c.h.b16 %v102
    %v202 = vunpack.c.l.b16 %v103
    %v203 = vunpack.c.h.b16 %v103
    %v204 = vunpack.c.l.b16 %v104
    %v205 = vunpack.c.h.b16 %v104
    %v206 = vunpack.c.l.b16 %v105
    %v207 = vunpack.c.h.b16 %v105
    %v208 = vunpack.c.l.b16 %v106
    %v209 = vunpack.c.h.b16 %v106
    %v210 = vunpack.c.l.b16 %v107
    %v211 = vunpack.c.h.b16 %v107
    %v212 = vunpack.c.l.b16 %v108
    %v213 = vunpack.c.h.b16 %v108
    %v214 = vunpack.c.l.b16 %v109
    %v215 = vunpack.c.h.b16 %v109
    %v216 = vunpack.c.l.b16 %v110
    %v217 = vunpack.c.h.b16 %v110
    %v218 = vunpack.c.l.b16 %v111
    %v219 = vunpack.c.h.b16 %v111
    %v220 = vunpack.c.l.b16 %v112
    %v221 = vunpack.c.h.b16 %v112
    %v222 = vunpack.c.l.b16 %v113
    %v223 = vunpack.c.h.b16 %v113
    %v224 = vunpack.c.l.b16 %v114
    %v225 = vunpack.c.h.b16 %v114
    %v226 = vunpack.c.l.b16 %v115
    %v227 = vunpack.c.h.b16 %v115
    %v228 = vpack.c.b16 %v166, %v164
    %v229 = vpack.c.b16 %v167, %v165
    %v230 = vpack.c.b16 %v170, %v168
    %v231 = vpack.c.b16 %v171, %v169
    %v232 = vpack.c.b16 %v174, %v172
    %v233 = vpack.c.b16 %v175, %v173
    %v234 = vpack.c.b16 %v178, %v176
    %v235 = vpack.c.b16 %v179, %v177
    %v236 = vpack.c.b16 %v182, %v180
    %v237 = vpack.c.b16 %v183, %v181
    %v238 = vpack.c.b16 %v186, %v184
    %v239 = vpack.c.b16 %v187, %v185
    %v240 = vpack.c.b16 %v190, %v188
    %v241 = vpack.c.b16 %v191, %v189
    %v242 = vpack.c.b16 %v194, %v192
    %v243 = vpack.c.b16 %v195, %v193
    %v244 = vpack.c.b16 %v198, %v196
    %v245 = vpack.c.b16 %v199, %v197
    %v246 = vpack.c.b16 %v202, %v200
    %v247 = vpack.c.b16 %v203, %v201
    %v248 = vpack.c.b16 %v206, %v204
    %v249 = vpack.c.b16 %v207, %v205
    %v250 = vpack.c.b16 %v210, %v208
    %v251 = vpack.c.b16 %v211, %v209
    %v252 = vpack.c.b16 %v214, %v212
    %v253 = vpack.c.b16 %v215, %v213
    %v254 = vpack.c.b16 %v218, %v216
    %v255 = vpack.c.b16 %v219, %v217
    %v256 = vpack.c.b16 %v222, %v220
    %v257 = vpack.c.b16 %v223, %v221
    %v258 = vpack.c.b16 %v226, %v224
    %v259 = vpack.c.b16 %v227, %v225
    %292 = vmatpush.bf16.msra.mxu0 %v242
    %293 = vmatpush.bf16.msra.mxu0 %v240
    %294 = vmatpush.bf16.msra.mxu0 %v238
    %295 = vmatpush.bf16.msra.mxu0 %v236
    %296 = vmatpush.bf16.msra.mxu0 %v234
    %297 = vmatpush.bf16.msra.mxu0 %v232
    %298 = vmatpush.bf16.msra.mxu0 %v230
    %299 = vmatpush.bf16.msra.mxu0 %v228
    %300 = vmatmul.bf16.gmra.mxu0 %v128
    %v301 = vpop.f32.mrf.mxu0
    %v302 = vadd.f32 %v118, %v301
    %v303 = vpop.f32.mrf.mxu0
    %v304 = vadd.f32 %v118, %v303
    %305 = vdwg.mxu0
    %306 = vmatpush.bf16.msra.mxu0 %v258
    %307 = vmatpush.bf16.msra.mxu0 %v256
    %308 = vmatpush.bf16.msra.mxu0 %v254
    %309 = vmatpush.bf16.msra.mxu0 %v252
    %310 = vmatpush.bf16.msra.mxu0 %v250
    %311 = vmatpush.bf16.msra.mxu0 %v248
    %312 = vmatpush.bf16.msra.mxu0 %v246
    %313 = vmatpush.bf16.msra.mxu0 %v244
    %314 = vmatmul.bf16.gmra.mxu0 %v129
    %v315 = vpop.f32.mrf.mxu0
    %v316 = vadd.f32 %v302, %v315
    %v317 = vpop.f32.mrf.mxu0
    %v318 = vadd.f32 %v304, %v317
    %319 = vdwg.mxu0
    %320 = vmatpush.bf16.msra.mxu0 %v243
    %321 = vmatpush.bf16.msra.mxu0 %v241
    %322 = vmatpush.bf16.msra.mxu0 %v239
    %323 = vmatpush.bf16.msra.mxu0 %v237
    %324 = vmatpush.bf16.msra.mxu0 %v235
    %325 = vmatpush.bf16.msra.mxu0 %v233
    %326 = vmatpush.bf16.msra.mxu0 %v231
    %327 = vmatpush.bf16.msra.mxu0 %v229
    %328 = vmatmul.bf16.gmra.mxu0 %v128
    %v329 = vpop.f32.mrf.mxu0
    %v330 = vadd.f32 %v119, %v329
    %v331 = vpop.f32.mrf.mxu0
    %v332 = vadd.f32 %v119, %v331
    %333 = vdwg.mxu0
    %334 = vmatpush.bf16.msra.mxu0 %v259
    %335 = vmatpush.bf16.msra.mxu0 %v257
    %336 = vmatpush.bf16.msra.mxu0 %v255
    %337 = vmatpush.bf16.msra.mxu0 %v253
    %338 = vmatpush.bf16.msra.mxu0 %v251
    %339 = vmatpush.bf16.msra.mxu0 %v249
    %340 = vmatpush.bf16.msra.mxu0 %v247
    %341 = vmatpush.bf16.msra.mxu0 %v245
    %342 = vmatmul.bf16.gmra.mxu0 %v129
    %v343 = vpop.f32.mrf.mxu0
    %v344 = vadd.f32 %v330, %v343
    %v345 = vpop.f32.mrf.mxu0
    %v346 = vadd.f32 %v332, %v345
    %347 = vdwg.mxu0
    %v348 = vmax.f32 %v316, 0.0
    %v349 = vmax.f32 %v344, 0.0
    %v350 = vmax.f32 %v318, 0.0
    %v351 = vmax.f32 %v346, 0.0
    %v352 = vpack.c.bf16 %v350, %v348
    %v353 = vpack.c.bf16 %v351, %v349
    %v354 = vld [vmem:[#allocation8] sm:$0xff]
    %v355 = vld [vmem:[#allocation8 + $0x8] sm:$0xff]
    %v356 = vld [vmem:[#allocation8 + $0x10] sm:$0xff]
    %v357 = vld [vmem:[#allocation8 + $0x18] sm:$0xff]
    %v358 = vld [vmem:[#allocation8 + $0x20] sm:$0xff]
    %v359 = vld [vmem:[#allocation8 + $0x28] sm:$0xff]
    %v360 = vld [vmem:[#allocation8 + $0x30] sm:$0xff]
    %v361 = vld [vmem:[#allocation8 + $0x38] sm:$0xff]
    %v362 = vld [vmem:[#allocation8 + $0x40] sm:$0xff]
    %v363 = vld [vmem:[#allocation8 + $0x48] sm:$0xff]
    %v364 = vld [vmem:[#allocation8 + $0x50] sm:$0xff]
    %v365 = vld [vmem:[#allocation8 + $0x58] sm:$0xff]
    %v366 = vld [vmem:[#allocation8 + $0x60] sm:$0xff]
    %v367 = vld [vmem:[#allocation8 + $0x68] sm:$0xff]
    %v368 = vld [vmem:[#allocation8 + $0x70] sm:$0xff]
    %v369 = vld [vmem:[#allocation8 + $0x78] sm:$0xff]
    %v370 = vld [vmem:[#allocation8 + $0x80] sm:$0xff]
    %v371 = vld [vmem:[#allocation8 + $0x88] sm:$0xff]
    %v372 = vld [vmem:[#allocation8 + $0x90] sm:$0xff]
    %v373 = vld [vmem:[#allocation8 + $0x98] sm:$0xff]
    %v374 = vld [vmem:[#allocation8 + $0xa0] sm:$0xff]
    %v375 = vld [vmem:[#allocation8 + $0xa8] sm:$0xff]
    %v376 = vld [vmem:[#allocation8 + $0xb0] sm:$0xff]
    %v377 = vld [vmem:[#allocation8 + $0xb8] sm:$0xff]
    %v378 = vld [vmem:[#allocation8 + $0xc0] sm:$0xff]
    %v379 = vld [vmem:[#allocation8 + $0xc8] sm:$0xff]
    %v380 = vld [vmem:[#allocation8 + $0xd0] sm:$0xff]
    %v381 = vld [vmem:[#allocation8 + $0xd8] sm:$0xff]
    %v382 = vld [vmem:[#allocation8 + $0xe0] sm:$0xff]
    %v383 = vld [vmem:[#allocation8 + $0xe8] sm:$0xff]
    %v384 = vld [vmem:[#allocation8 + $0xf0] sm:$0xff]
    %v385 = vld [vmem:[#allocation8 + $0xf8] sm:$0xff]
    %v386 = vld [vmem:[%s4] sm:$0x3]
    %v388 = vperm.slane %v386, 0
    %v389 = vperm.slane %v386, 1
    %v424 = vunpack.c.l.b16 %v354
    %v425 = vunpack.c.h.b16 %v354
    %v426 = vunpack.c.l.b16 %v355
    %v427 = vunpack.c.h.b16 %v355
    %v428 = vunpack.c.l.b16 %v356
    %v429 = vunpack.c.h.b16 %v356
    %v430 = vunpack.c.l.b16 %v357
    %v431 = vunpack.c.h.b16 %v357
    %v432 = vunpack.c.l.b16 %v358
    %v433 = vunpack.c.h.b16 %v358
    %v434 = vunpack.c.l.b16 %v359
    %v435 = vunpack.c.h.b16 %v359
    %v436 = vunpack.c.l.b16 %v360
    %v437 = vunpack.c.h.b16 %v360
    %v438 = vunpack.c.l.b16 %v361
    %v439 = vunpack.c.h.b16 %v361
    %v440 = vunpack.c.l.b16 %v362
    %v441 = vunpack.c.h.b16 %v362
    %v442 = vunpack.c.l.b16 %v363
    %v443 = vunpack.c.h.b16 %v363
    %v444 = vunpack.c.l.b16 %v364
    %v445 = vunpack.c.h.b16 %v364
    %v446 = vunpack.c.l.b16 %v365
    %v447 = vunpack.c.h.b16 %v365
    %v448 = vunpack.c.l.b16 %v366
    %v449 = vunpack.c.h.b16 %v366
    %v450 = vunpack.c.l.b16 %v367
    %v451 = vunpack.c.h.b16 %v367
    %v452 = vunpack.c.l.b16 %v368
    %v453 = vunpack.c.h.b16 %v368
    %v454 = vunpack.c.l.b16 %v369
    %v455 = vunpack.c.h.b16 %v369
    %v456 = vunpack.c.l.b16 %v370
    %v457 = vunpack.c.h.b16 %v370
    %v458 = vunpack.c.l.b16 %v371
    %v459 = vunpack.c.h.b16 %v371
    %v460 = vunpack.c.l.b16 %v372
    %v461 = vunpack.c.h.b16 %v372
    %v462 = vunpack.c.l.b16 %v373
    %v463 = vunpack.c.h.b16 %v373
    %v464 = vunpack.c.l.b16 %v374
    %v465 = vunpack.c.h.b16 %v374
    %v466 = vunpack.c.l.b16 %v375
    %v467 = vunpack.c.h.b16 %v375
    %v468 = vunpack.c.l.b16 %v376
    %v469 = vunpack.c.h.b16 %v376
    %v470 = vunpack.c.l.b16 %v377
    %v471 = vunpack.c.h.b16 %v377
    %v472 = vunpack.c.l.b16 %v378
    %v473 = vunpack.c.h.b16 %v378
    %v474 = vunpack.c.l.b16 %v379
    %v475 = vunpack.c.h.b16 %v379
    %v476 = vunpack.c.l.b16 %v380
    %v477 = vunpack.c.h.b16 %v380
    %v478 = vunpack.c.l.b16 %v381
    %v479 = vunpack.c.h.b16 %v381
    %v480 = vunpack.c.l.b16 %v382
    %v481 = vunpack.c.h.b16 %v382
    %v482 = vunpack.c.l.b16 %v383
    %v483 = vunpack.c.h.b16 %v383
    %v484 = vunpack.c.l.b16 %v384
    %v485 = vunpack.c.h.b16 %v384
    %v486 = vunpack.c.l.b16 %v385
    %v487 = vunpack.c.h.b16 %v385
    %v488 = vpack.c.b16 %v426, %v424
    %v489 = vpack.c.b16 %v427, %v425
    %v490 = vpack.c.b16 %v430, %v428
    %v491 = vpack.c.b16 %v431, %v429
    %v492 = vpack.c.b16 %v434, %v432
    %v493 = vpack.c.b16 %v435, %v433
    %v494 = vpack.c.b16 %v438, %v436
    %v495 = vpack.c.b16 %v439, %v437
    %v496 = vpack.c.b16 %v442, %v440
    %v497 = vpack.c.b16 %v443, %v441
    %v498 = vpack.c.b16 %v446, %v444
    %v499 = vpack.c.b16 %v447, %v445
    %v500 = vpack.c.b16 %v450, %v448
    %v501 = vpack.c.b16 %v451, %v449
    %v502 = vpack.c.b16 %v454, %v452
    %v503 = vpack.c.b16 %v455, %v453
    %v504 = vpack.c.b16 %v458, %v456
    %v505 = vpack.c.b16 %v459, %v457
    %v506 = vpack.c.b16 %v462, %v460
    %v507 = vpack.c.b16 %v463, %v461
    %v508 = vpack.c.b16 %v466, %v464
    %v509 = vpack.c.b16 %v467, %v465
    %v510 = vpack.c.b16 %v470, %v468
    %v511 = vpack.c.b16 %v471, %v469
    %v512 = vpack.c.b16 %v474, %v472
    %v513 = vpack.c.b16 %v475, %v473
    %v514 = vpack.c.b16 %v478, %v476
    %v515 = vpack.c.b16 %v479, %v477
    %v516 = vpack.c.b16 %v482, %v480
    %v517 = vpack.c.b16 %v483, %v481
    %v518 = vpack.c.b16 %v486, %v484
    %v519 = vpack.c.b16 %v487, %v485
    %552 = vmatpush.bf16.msra.mxu0 %v502
    %553 = vmatpush.bf16.msra.mxu0 %v500
    %554 = vmatpush.bf16.msra.mxu0 %v498
    %555 = vmatpush.bf16.msra.mxu0 %v496
    %556 = vmatpush.bf16.msra.mxu0 %v494
    %557 = vmatpush.bf16.msra.mxu0 %v492
    %558 = vmatpush.bf16.msra.mxu0 %v490
    %559 = vmatpush.bf16.msra.mxu0 %v488
    %560 = vmatmul.bf16.gmra.mxu0 %v352
    %v561 = vpop.f32.mrf.mxu0
    %v562 = vadd.f32 %v388, %v561
    %v563 = vpop.f32.mrf.mxu0
    %v564 = vadd.f32 %v388, %v563
    %565 = vdwg.mxu0
    %566 = vmatpush.bf16.msra.mxu0 %v518
    %567 = vmatpush.bf16.msra.mxu0 %v516
    %568 = vmatpush.bf16.msra.mxu0 %v514
    %569 = vmatpush.bf16.msra.mxu0 %v512
    %570 = vmatpush.bf16.msra.mxu0 %v510
    %571 = vmatpush.bf16.msra.mxu0 %v508
    %572 = vmatpush.bf16.msra.mxu0 %v506
    %573 = vmatpush.bf16.msra.mxu0 %v504
    %574 = vmatmul.bf16.gmra.mxu0 %v353
    %v575 = vpop.f32.mrf.mxu0
    %v576 = vadd.f32 %v562, %v575
    %v577 = vpop.f32.mrf.mxu0
    %v578 = vadd.f32 %v564, %v577
    %579 = vdwg.mxu0
    %580 = vmatpush.bf16.msra.mxu0 %v503
    %581 = vmatpush.bf16.msra.mxu0 %v501
    %582 = vmatpush.bf16.msra.mxu0 %v499
    %583 = vmatpush.bf16.msra.mxu0 %v497
    %584 = vmatpush.bf16.msra.mxu0 %v495
    %585 = vmatpush.bf16.msra.mxu0 %v493
    %586 = vmatpush.bf16.msra.mxu0 %v491
    %587 = vmatpush.bf16.msra.mxu0 %v489
    %588 = vmatmul.bf16.gmra.mxu0 %v352
    %v589 = vpop.f32.mrf.mxu0
    %v590 = vadd.f32 %v389, %v589
    %v591 = vpop.f32.mrf.mxu0
    %v592 = vadd.f32 %v389, %v591
    %593 = vdwg.mxu0
    %594 = vmatpush.bf16.msra.mxu0 %v519
    %595 = vmatpush.bf16.msra.mxu0 %v517
    %596 = vmatpush.bf16.msra.mxu0 %v515
    %597 = vmatpush.bf16.msra.mxu0 %v513
    %598 = vmatpush.bf16.msra.mxu0 %v511
    %599 = vmatpush.bf16.msra.mxu0 %v509
    %600 = vmatpush.bf16.msra.mxu0 %v507
    %601 = vmatpush.bf16.msra.mxu0 %v505
    %602 = vmatmul.bf16.gmra.mxu0 %v353
    %v603 = vpop.f32.mrf.mxu0
    %v604 = vadd.f32 %v590, %v603
    %v605 = vpop.f32.mrf.mxu0
    %v606 = vadd.f32 %v592, %v605
    %607 = vdwg.mxu0
    %608 = vst [vmem:[#allocation10] sm:$0xff] %v576
    %609 = vst [vmem:[#allocation10 + $0x8] sm:$0xff] %v604
    %610 = vst [vmem:[#allocation10 + $0x10] sm:$0xff] %v578
    %611 = vst [vmem:[#allocation10 + $0x18] sm:$0xff] %v606
    // Predicated region
    $region38: #{tpu_custom_call.1} parent=1 // pred_check
      _
    $region39: #{tpu_custom_call.1} parent=1 // pred_check_branch
      %613 = sbr.rel (0) target = $region41
    $region40: #{tpu_custom_call.1} parent=1 // pred_region
      %615 = vsyncadd [#allocation4], 0
      %s616 = sshll.u32 [#allocation10], 4
      %s617 = int_to_ptr.vmem [resolvable:$true] %s616
      %s618 = sshll.u32 %s5, 4
      %s619 = int_to_ptr.hbm [resolvable:$true] %s618
      %624 = dma.vmem_to_hbm [thread:$0]  %s617, 512, %s619, [#allocation4], 256, 256, 16
    $region41: #{tpu_custom_call.1} parent=1 // pred_fallthru
      _
    // Predicated region
    $region42: #{tpu_custom_call.1} parent=1 // pred_check
      _
    $region43: #{tpu_custom_call.1} parent=1 // pred_check_branch
      %626 = sbr.rel (0) target = $region45
    $region44: #{tpu_custom_call.1} parent=1 // pred_region
      %628 = dma.done [#allocation4], 512
    $region45: #{tpu_custom_call.1} parent=1 // pred_fallthru
      _
    %629 = vsyncpa [#allocation3], 1
    %630 = vsyncpa [#allocation6], 1
    %631 = vsyncpa [#allocation9], 1
    %632 = vsyncpa [#allocation4], 1

</llo_original>
